<compile_context>
chip_gen: v7x
topology: tpu7x:2x2x1
jax: 0.10.0
libtpu: 0.0.40
codegen_flags: <defaults>
</compile_context>

<pallas_src>
import math
from functools import partial

import jax
import jax.numpy as jnp
import numpy as np
from jax.experimental import pallas as pl
from jax.experimental.pallas import tpu as pltpu


# ----------------------------------------------------------------------------- helpers

def _pick_tile(total, cap, align):
    """Largest multiple-of-`align` divisor of `total` that is <= cap (else full)."""
    if total <= cap:
        return total
    t = min(cap, total)
    t -= t % align
    while t >= align:
        if total % t == 0:
            return t
        t -= align
    return total  # ragged size: single full tile keeps BlockSpec constraints legal


def _vmem_capacity_bytes():
    """Physical VMEM of the local chip; conservative v7x fallback if unqueryable."""
    try:
        return int(pltpu.get_tpu_info().vmem_capacity_bytes)
    except Exception:
        return 64 << 20


def _pick_tb(B, mm_dtype):
    """Batch tile: 16-aligned for bf16 packing; n_b >= 2 when B >= 16 (v7x megacore)."""
    align = 16 if mm_dtype == jnp.bfloat16 else 8
    if B < align:
        return B
    cap = 256
    if B >= 16:
        cap = min(cap, B // 2)          # both TensorCores get batch-tile work
        cap -= cap % align
        cap = max(cap, align)
    return _pick_tile(B, cap, align)


def _pick_tc(C, D, tb, mm_bytes, x_bytes, vmem_cap):
    """Class tile: largest 128-multiple divisor of C that fits the VMEM budget, <=2048."""
    budget = int(vmem_cap * 0.55)       # leave headroom for compiler internals
    fixed = 2 * tb * D * x_bytes + tb * D * mm_bytes + 8 * tb * 4 + (8 << 10)
    per_tc = 2 * D * mm_bytes + 2 * tb * 4   # dbl-buffered W rows + logits columns
    tc_fit = (budget - fixed) // per_tc if budget > fixed else 0
    cap = max(128, min(2048, (tc_fit // 128) * 128))
    return _pick_tile(C, cap, 128)


def prepare_weight(weight, matmul_dtype=jnp.float32):
    """Row-normalize the classifier weight in f32, then cast.

    Call once (or jit-cache across training steps) to hoist both the normalization
    and the optional bf16 cast out of the per-step path; pass the result with
    weight_is_prenormalized=True.
    """
    wf = weight.astype(jnp.float32)
    inv = jnp.minimum(jax.lax.rsqrt(jnp.sum(wf * wf, axis=1, keepdims=True)), 1e5)
    return (wf * inv).astype(matmul_dtype)


def _normalized_w_tile(w_ref, mm_dtype, norm_w):
    """Weight tile for the MXU: either already normalized, or normalize in-kernel."""
    w = w_ref[...]
    if not norm_w:
        return w                                    # pre-normalized + pre-cast in wrapper
    wf = w.astype(jnp.float32)
    w_inv = jnp.minimum(jax.lax.rsqrt(jnp.sum(wf * wf, axis=1, keepdims=True)), 1e5)
    return (wf * w_inv).astype(mm_dtype)


# ----------------------------------------------------------------------------- kernels

def _loss_step(x_ref, w_ref, lab_ref, logits_ref, loss_ref,
               xn_s, m_s, l_s, t_s, *, s, margin, tc, mm_dtype, norm_w):
    kc = pl.program_id(1)                           # class-tile index (reduction axis)

    @pl.when(kc == 0)
    def _():
        # Cache s * normalize(x) once per batch tile; init online-softmax accumulators.
        xf = x_ref[...].astype(jnp.float32)
        x_inv = jnp.minimum(jax.lax.rsqrt(jnp.sum(xf * xf, axis=1, keepdims=True)), 1e5)
        xn_s[...] = (xf * (s * x_inv)).astype(mm_dtype)
        m_s[...] = jnp.full_like(m_s, -jnp.inf)
        l_s[...] = jnp.zeros_like(l_s)
        t_s[...] = jnp.zeros_like(t_s)

    w_mm = _normalized_w_tile(w_ref, mm_dtype, norm_w)

    # Contract feature axis of both operands directly (no w.T materialization).
    # Result is already s * cos_theta because s is folded into the cached x rows.
    logits = jax.lax.dot_general(
        xn_s[...], w_mm,
        dimension_numbers=(((1,), (1,)), ((), ())),
        preferred_element_type=jnp.float32)         # (tb, tc) f32

    # implicit one-hot: loop-invariant local column iota vs. shifted label
    col = jax.lax.broadcasted_iota(jnp.int32, logits.shape, 1)
    one_hot = col == (lab_ref[...] - kc * tc)
    logits = logits - jnp.where(one_hot, s * margin, 0.0)

    if logits_ref is not None:
        logits_ref[...] = logits

    # online logsumexp over class tiles (vector accumulators, one exp per element)
    m_prev = m_s[...]
    m_new = jnp.maximum(m_prev, jnp.max(logits, axis=1, keepdims=True))
    l_s[...] = l_s[...] * jnp.exp(m_prev - m_new) + \
               jnp.sum(jnp.exp(logits - m_new), axis=1, keepdims=True)
    m_s[...] = m_new

    # target logit accumulation (exactly one hit across all class tiles)
    t_s[...] += jnp.sum(jnp.where(one_hot, logits, 0.0), axis=1, keepdims=True)

    @pl.when(kc == pl.num_programs(1) - 1)
    def _():
        # per-sample CE loss = logsumexp(logits) - logits[label]; mean taken outside
        loss_ref[...] = m_s[...] + jnp.log(l_s[...]) - t_s[...]


def _nsl_loss_kernel(x_ref, w_ref, lab_ref, logits_ref, loss_ref,
                     xn_s, m_s, l_s, t_s, *, s, margin, tc, mm_dtype, norm_w):
    _loss_step(x_ref, w_ref, lab_ref, logits_ref, loss_ref, xn_s, m_s, l_s, t_s,
               s=s, margin=margin, tc=tc, mm_dtype=mm_dtype, norm_w=norm_w)


def _nsl_loss_only_kernel(x_ref, w_ref, lab_ref, loss_ref,
                          xn_s, m_s, l_s, t_s, *, s, margin, tc, mm_dtype, norm_w):
    # loss-only path: no (B, C) logits HBM writeback
    _loss_step(x_ref, w_ref, lab_ref, None, loss_ref, xn_s, m_s, l_s, t_s,
               s=s, margin=margin, tc=tc, mm_dtype=mm_dtype, norm_w=norm_w)


def _nsl_cos_kernel(x_ref, w_ref, cos_ref, xn_s, *, mm_dtype, norm_w):
    # inference path (label=None): cos_theta only, no loss / transcendental work
    kc = pl.program_id(1)

    @pl.when(kc == 0)
    def _():
        xf = x_ref[...].astype(jnp.float32)
        x_inv = jnp.minimum(jax.lax.rsqrt(jnp.sum(xf * xf, axis=1, keepdims=True)), 1e5)
        xn_s[...] = (xf * x_inv).astype(mm_dtype)

    w_mm = _normalized_w_tile(w_ref, mm_dtype, norm_w)
    cos_ref[...] = jax.lax.dot_general(
        xn_s[...], w_mm,
        dimension_numbers=(((1,), (1,)), ((), ())),
        preferred_element_type=jnp.float32)


# ----------------------------------------------------------------------------- wrapper

def normalized_softmax_loss(x, weight, label=None, *, m=0.4, s=64.0,
                            tb=None, tc=None, matmul_dtype=jnp.float32,
                            weight_is_prenormalized=False, return_logits=True):
    """Forward of Normalized_Softmax_Loss.

    Returns cos_theta if label is None, else (logits, loss) -- or only loss if
    return_logits=False (skips the (B, C) f32 HBM writeback).
    matmul_dtype=jnp.bfloat16 streams the (f32-normalized) weight in bf16 and runs
    a bf16 MXU matmul with f32 accumulation.
    """
    B, D = x.shape
    C, D2 = weight.shape
    assert D == D2, "feature dims must match"

    mm_bytes = jnp.dtype(matmul_dtype).itemsize
    x_bytes = jnp.dtype(x.dtype).itemsize
    vmem_cap = _vmem_capacity_bytes()

    if tb is None:
        tb = _pick_tb(B, matmul_dtype)
    if tc is None:
        tc = _pick_tc(C, D, tb, mm_bytes, x_bytes, vmem_cap)
    assert B % tb == 0 and C % tc == 0
    n_b, n_c = B // tb, C // tc

    # Weight prep: hoist normalization (f32) + cast out of the kernel whenever the
    # kernel would otherwise re-normalize the same weight tile n_b (>1) times.
    if weight_is_prenormalized:
        w_in = weight if weight.dtype == matmul_dtype else weight.astype(matmul_dtype)
        norm_w = False
    elif n_b > 1:
        w_in = prepare_weight(weight, matmul_dtype)
        norm_w = False
    else:
        w_in = weight if weight.dtype == matmul_dtype else weight.astype(matmul_dtype)
        norm_w = True

    # VMEM accounting (double-buffered tiles + scratch) -> explicit scoped limit.
    need = (2 * tb * D * x_bytes + tb * D * mm_bytes
            + 2 * tc * D * mm_bytes + 2 * tb * tc * 4 + 16 * tb * 4)
    vmem_limit = int(min(int(vmem_cap * 0.9), max(need * 2, 32 << 20)))
    cparams = pltpu.CompilerParams(
        dimension_semantics=("parallel", "arbitrary"),
        vmem_limit_bytes=vmem_limit)

    x_spec = pl.BlockSpec((tb, D), lambda ib, kc: (ib, 0))
    w_spec = pl.BlockSpec((tc, D), lambda ib, kc: (kc, 0))

    if label is None:
        return pl.pallas_call(
            partial(_nsl_cos_kernel, mm_dtype=matmul_dtype, norm_w=norm_w),
            out_shape=jax.ShapeDtypeStruct((B, C), jnp.float32),
            grid_spec=pltpu.PrefetchScalarGridSpec(
                num_scalar_prefetch=0,
                grid=(n_b, n_c),
                in_specs=[x_spec, w_spec],
                out_specs=pl.BlockSpec((tb, tc), lambda ib, kc: (ib, kc)),
                scratch_shapes=[pltpu.VMEM((tb, D), matmul_dtype)],
            ),
            compiler_params=cparams,
        )(x, w_in)

    lab2 = label.astype(jnp.int32).reshape(B, 1)
    static = dict(s=float(s), margin=float(m), tc=tc,
                  mm_dtype=matmul_dtype, norm_w=norm_w)
    in_specs = [x_spec, w_spec, pl.BlockSpec((tb, 1), lambda ib, kc: (ib, 0))]
    scratch = [
        pltpu.VMEM((tb, D), matmul_dtype),   # cached s * normalize(x) tile
        pltpu.VMEM((tb, 1), jnp.float32),    # running max
        pltpu.VMEM((tb, 1), jnp.float32),    # running sum(exp)
        pltpu.VMEM((tb, 1), jnp.float32),    # target logit
    ]

    if return_logits:
        logits, per_sample = pl.pallas_call(
            partial(_nsl_loss_kernel, **static),
            out_shape=(jax.ShapeDtypeStruct((B, C), jnp.float32),
                       jax.ShapeDtypeStruct((B, 1), jnp.float32)),
            grid_spec=pltpu.PrefetchScalarGridSpec(
                num_scalar_prefetch=0,
                grid=(n_b, n_c),
                in_specs=in_specs,
                out_specs=[pl.BlockSpec((tb, tc), lambda ib, kc: (ib, kc)),
                           pl.BlockSpec((tb, 1), lambda ib, kc: (ib, 0))],
                scratch_shapes=scratch,
            ),
            compiler_params=cparams,
        )(x, w_in, lab2)
        return logits, jnp.mean(per_sample)     # F.cross_entropy mean reduction

    per_sample = pl.pallas_call(
        partial(_nsl_loss_only_kernel, **static),
        out_shape=jax.ShapeDtypeStruct((B, 1), jnp.float32),
        grid_spec=pltpu.PrefetchScalarGridSpec(
            num_scalar_prefetch=0,
            grid=(n_b, n_c),
            in_specs=in_specs,
            out_specs=pl.BlockSpec((tb, 1), lambda ib, kc: (ib, 0)),
            scratch_shapes=scratch,
        ),
        compiler_params=cparams,
    )(x, w_in, lab2)
    return jnp.mean(per_sample)


# ----------------------------------------------------------------------------- reference

def _reference(x, weight, label, m=0.4, s=64.0):
    x_n = x / jnp.maximum(jnp.linalg.norm(x, axis=1, keepdims=True), 1e-5)
    w_n = weight / jnp.maximum(jnp.linalg.norm(weight, axis=1, keepdims=True), 1e-5)
    cos = x_n @ w_n.T
    if label is None:
        return cos
    one_hot = jax.nn.one_hot(label, weight.shape[0], dtype=cos.dtype)
    logits = s * (cos - one_hot * m)
    lse = jax.scipy.special.logsumexp(logits, axis=1)
    tgt = jnp.take_along_axis(logits, label[:, None], axis=1)[:, 0]
    return logits, jnp.mean(lse - tgt)


if __name__ == "__main__":
    m_, s_ = 0.4, 64.0
    D, C = 128, 512                 # in_features, out_features

    key = jax.random.PRNGKey(0)
    kx, kw, kl = jax.random.split(key, 3)

    # kaiming_normal_(a=1, mode='fan_in', leaky_relu): gain=1, std = 1/sqrt(fan_in)
    weight = jax.random.normal(kw, (C, D), dtype=jnp.float32) / math.sqrt(D)

    # ---- Case A: small batch (n_b == 1, in-kernel weight normalization) --------------
    B = 8
    x = jax.random.normal(kx, (B, D), dtype=jnp.float32)
    label = jax.random.randint(kl, (B,), 0, C, dtype=jnp.int32)

    logits_ref, loss_ref = _reference(x, weight, label, m=m_, s=s_)
    cos_ref = _reference(x, weight, None)

    # 1) f32, tc=128 -> 4 class tiles (exercises the online-softmax accumulation)
    logits, loss = normalized_softmax_loss(x, weight, label, m=m_, s=s_, tc=128)
    jax.block_until_ready((logits, loss))
    np.testing.assert_allclose(np.asarray(logits), np.asarray(logits_ref),
                               rtol=1e-4, atol=1e-3)
    np.testing.assert_allclose(float(loss), float(loss_ref), rtol=1e-4, atol=1e-3)

    # 2) auto tiling (single lane-dense class tile here)
    logits2, loss2 = normalized_softmax_loss(x, weight, label, m=m_, s=s_)
    jax.block_until_ready((logits2, loss2))
    np.testing.assert_allclose(np.asarray(logits2), np.asarray(logits_ref),
                               rtol=1e-4, atol=1e-3)
    np.testing.assert_allclose(float(loss2), float(loss_ref), rtol=1e-4, atol=1e-3)

    # 3) label=None inference path: cos_theta only
    cos_only = normalized_softmax_loss(x, weight, None, m=m_, s=s_, tc=128)
    jax.block_until_ready(cos_only)
    np.testing.assert_allclose(np.asarray(cos_only), np.asarray(cos_ref),
                               rtol=1e-4, atol=1e-4)

    # 4) loss-only path (no logits HBM writeback)
    loss_only = normalized_softmax_loss(x, weight, label, m=m_, s=s_,
                                        return_logits=False, tc=128)
    jax.block_until_ready(loss_only)
    np.testing.assert_allclose(float(loss_only), float(loss_ref), rtol=1e-4, atol=1e-3)

    # ---- Case B: multi batch-tile (n_b > 1 -> wrapper pre-normalized weight) ---------
    B2 = 32
    kx2, kl2 = jax.random.split(jax.random.PRNGKey(1))
    x2 = jax.random.normal(kx2, (B2, D), dtype=jnp.float32)
    label2 = jax.random.randint(kl2, (B2,), 0, C, dtype=jnp.int32)
    logits_ref2, loss_ref2 = _reference(x2, weight, label2, m=m_, s=s_)

    # 5) f32, forced small tiles -> 4 batch tiles x 4 class tiles
    logits3, loss3 = normalized_softmax_loss(x2, weight, label2, m=m_, s=s_, tb=8, tc=128)
    jax.block_until_ready((logits3, loss3))
    np.testing.assert_allclose(np.asarray(logits3), np.asarray(logits_ref2),
                               rtol=1e-4, atol=1e-3)
    np.testing.assert_allclose(float(loss3), float(loss_ref2), rtol=1e-4, atol=1e-3)

    # 6) bf16-streamed weight (normalized in f32, cast once) + bf16 MXU; loose check
    logits_bf, loss_bf = normalized_softmax_loss(x2, weight, label2, m=m_, s=s_,
                                                 matmul_dtype=jnp.bfloat16)
    jax.block_until_ready((logits_bf, loss_bf))
    np.testing.assert_allclose(np.asarray(logits_bf), np.asarray(logits_ref2),
                               rtol=0.05, atol=1.0)
    np.testing.assert_allclose(float(loss_bf), float(loss_ref2), rtol=0.1, atol=1.0)

    print("KERNEL_OK")
</pallas_src>

<mosaic_0001>
module attributes {stable_mosaic.version = 11 : i64} {
  func.func @_nsl_loss_kernel(%arg0: i32, %arg1: i32, %arg2: memref<8x128xf32, #tpu.memory_space<vmem>>, %arg3: memref<128x128xf32, #tpu.memory_space<vmem>>, %arg4: memref<8x1xi32, #tpu.memory_space<vmem>>, %arg5: memref<8x128xf32, #tpu.memory_space<vmem>>, %arg6: memref<8x1xf32, #tpu.memory_space<vmem>>, %arg7: memref<8x128xf32, #tpu.memory_space<vmem>>, %arg8: memref<8x1xf32, #tpu.memory_space<vmem>>, %arg9: memref<8x1xf32, #tpu.memory_space<vmem>>, %arg10: memref<8x1xf32, #tpu.memory_space<vmem>>) attributes {dimension_semantics = [#tpu.dimension_semantics<parallel>, #tpu.dimension_semantics<arbitrary>], iteration_bounds = array<i64: 1, 4>, scalar_prefetch = 0 : i64, scratch_operands = 4 : i64, tpu.core_type = #tpu.core_type<tc>, window_params = [{transform_indices = @transform_0, window_bounds = array<i64: 8, 128>}, {transform_indices = @transform_1, window_bounds = array<i64: 128, 128>}, {transform_indices = @transform_2, window_bounds = array<i64: 8, 1>}, {transform_indices = @transform_3, window_bounds = array<i64: 8, 128>}, {transform_indices = @transform_4, window_bounds = array<i64: 8, 1>}]} {
    %c0_i32 = arith.constant 0 : i32
    %0 = arith.cmpi eq, %arg1, %c0_i32 : i32
    %1 = arith.extui %0 : i1 to i32
    %c0_i32_0 = arith.constant 0 : i32
    %2 = arith.cmpi ne, %1, %c0_i32_0 : i32
    scf.if %2 {
      %c0_29 = arith.constant 0 : index
      %c0_30 = arith.constant 0 : index
      %52 = vector.load %arg2[%c0_29, %c0_30] : memref<8x128xf32, #tpu.memory_space<vmem>>, vector<8x128xf32>
      %53 = arith.mulf %52, %52 : vector<8x128xf32>
      %cst_31 = arith.constant dense<0.000000e+00> : vector<8xf32>
      %54 = vector.multi_reduction <add>, %53, %cst_31 [1] : vector<8x128xf32> to vector<8xf32>
      %55 = vector.shape_cast %54 : vector<8xf32> to vector<8x1xf32>
      %56 = math.rsqrt %55 : vector<8x1xf32>
      %cst_32 = arith.constant 1.000000e+05 : f32
      %57 = vector.broadcast %cst_32 : f32 to vector<8x1xf32>
      %58 = arith.minimumf %56, %57 : vector<8x1xf32>
      %cst_33 = arith.constant 6.400000e+01 : f32
      %59 = vector.broadcast %cst_33 : f32 to vector<8x1xf32>
      %60 = arith.mulf %59, %58 : vector<8x1xf32>
      %61 = vector.broadcast %60 : vector<8x1xf32> to vector<8x128xf32>
      %62 = arith.mulf %52, %61 : vector<8x128xf32>
      %c0_34 = arith.constant 0 : index
      %c0_35 = arith.constant 0 : index
      %63 = vector.load %arg7[%c0_34, %c0_35] : memref<8x128xf32, #tpu.memory_space<vmem>>, vector<8x128xf32>
      tpu.vector_store %arg7[%c0_34, %c0_35], %62 {strides = array<i32>} : memref<8x128xf32, #tpu.memory_space<vmem>>, vector<8x128xf32>,
      %cst_36 = arith.constant 0xFF800000 : f32
      %64 = vector.broadcast %cst_36 : f32 to vector<8x1xf32>
      %c0_37 = arith.constant 0 : index
      %c0_38 = arith.constant 0 : index
      %65 = vector.load %arg8[%c0_37, %c0_38] : memref<8x1xf32, #tpu.memory_space<vmem>>, vector<8x1xf32>
      tpu.vector_store %arg8[%c0_37, %c0_38], %64 {strides = array<i32>} : memref<8x1xf32, #tpu.memory_space<vmem>>, vector<8x1xf32>,
      %cst_39 = arith.constant 0.000000e+00 : f32
      %66 = vector.broadcast %cst_39 : f32 to vector<8x1xf32>
      %c0_40 = arith.constant 0 : index
      %c0_41 = arith.constant 0 : index
      %67 = vector.load %arg9[%c0_40, %c0_41] : memref<8x1xf32, #tpu.memory_space<vmem>>, vector<8x1xf32>
      tpu.vector_store %arg9[%c0_40, %c0_41], %66 {strides = array<i32>} : memref<8x1xf32, #tpu.memory_space<vmem>>, vector<8x1xf32>,
      %cst_42 = arith.constant 0.000000e+00 : f32
      %68 = vector.broadcast %cst_42 : f32 to vector<8x1xf32>
      %c0_43 = arith.constant 0 : index
      %c0_44 = arith.constant 0 : index
      %69 = vector.load %arg10[%c0_43, %c0_44] : memref<8x1xf32, #tpu.memory_space<vmem>>, vector<8x1xf32>
      tpu.vector_store %arg10[%c0_43, %c0_44], %68 {strides = array<i32>} : memref<8x1xf32, #tpu.memory_space<vmem>>, vector<8x1xf32>,
    } else {
    }
    %c0 = arith.constant 0 : index
    %c0_1 = arith.constant 0 : index
    %3 = vector.load %arg3[%c0, %c0_1] : memref<128x128xf32, #tpu.memory_space<vmem>>, vector<128x128xf32>
    %4 = arith.mulf %3, %3 : vector<128x128xf32>
    %cst = arith.constant dense<0.000000e+00> : vector<128xf32>
    %5 = vector.multi_reduction <add>, %4, %cst [1] : vector<128x128xf32> to vector<128xf32>
    %6 = vector.shape_cast %5 : vector<128xf32> to vector<128x1xf32>
    %7 = math.rsqrt %6 : vector<128x1xf32>
    %cst_2 = arith.constant 1.000000e+05 : f32
    %8 = vector.broadcast %cst_2 : f32 to vector<128x1xf32>
    %9 = arith.minimumf %7, %8 : vector<128x1xf32>
    %10 = vector.broadcast %9 : vector<128x1xf32> to vector<128x128xf32>
    %11 = arith.mulf %3, %10 : vector<128x128xf32>
    %c0_3 = arith.constant 0 : index
    %c0_4 = arith.constant 0 : index
    %12 = vector.load %arg7[%c0_3, %c0_4] : memref<8x128xf32, #tpu.memory_space<vmem>>, vector<8x128xf32>
    %cst_5 = arith.constant dense<0.000000e+00> : vector<8x128xf32>
    %13 = tpu.matmul %12, %11, %cst_5 {dimension_numbers = #tpu.dot_dimension_numbers<[1], [1], [0], [0], [0, 0, 1, 0], [], []>} : vector<8x128xf32>, vector<128x128xf32>, vector<8x128xf32> -> vector<8x128xf32>
    %14 = tpu.iota {dimensions = array<i32: 1>} : vector<8x128xi32>
    %c0_6 = arith.constant 0 : index
    %c0_7 = arith.constant 0 : index
    %15 = vector.load %arg4[%c0_6, %c0_7] : memref<8x1xi32, #tpu.memory_space<vmem>>, vector<8x1xi32>
    %c128_i32 = arith.constant 128 : i32
    %16 = arith.muli %arg1, %c128_i32 : i32
    %17 = vector.broadcast %16 : i32 to vector<8x1xi32>
    %18 = arith.subi %15, %17 : vector<8x1xi32>
    %19 = vector.broadcast %18 : vector<8x1xi32> to vector<8x128xi32>
    %20 = arith.cmpi eq, %14, %19 : vector<8x128xi32>
    %cst_8 = arith.constant 2.560000e+01 : f32
    %cst_9 = arith.constant 0.000000e+00 : f32
    %21 = vector.broadcast %cst_8 : f32 to vector<8x128xf32>
    %22 = vector.broadcast %cst_9 : f32 to vector<8x128xf32>
    %23 = arith.select %20, %21, %22 : vector<8x128xi1>, vector<8x128xf32>
    %24 = arith.subf %13, %23 : vector<8x128xf32>
    %c0_10 = arith.constant 0 : index
    %c0_11 = arith.constant 0 : index
    %25 = vector.load %arg5[%c0_10, %c0_11] : memref<8x128xf32, #tpu.memory_space<vmem>>, vector<8x128xf32>
    tpu.vector_store %arg5[%c0_10, %c0_11], %24 {strides = array<i32>} : memref<8x128xf32, #tpu.memory_space<vmem>>, vector<8x128xf32>,
    %c0_12 = arith.constant 0 : index
    %c0_13 = arith.constant 0 : index
    %26 = vector.load %arg8[%c0_12, %c0_13] : memref<8x1xf32, #tpu.memory_space<vmem>>, vector<8x1xf32>
    %cst_14 = arith.constant dense<0xFF800000> : vector<8xf32>
    %27 = vector.multi_reduction <maximumf>, %24, %cst_14 [1] : vector<8x128xf32> to vector<8xf32>
    %28 = vector.shape_cast %27 : vector<8xf32> to vector<8x1xf32>
    %29 = arith.maximumf %26, %28 : vector<8x1xf32>
    %c0_15 = arith.constant 0 : index
    %c0_16 = arith.constant 0 : index
    %30 = vector.load %arg9[%c0_15, %c0_16] : memref<8x1xf32, #tpu.memory_space<vmem>>, vector<8x1xf32>
    %31 = arith.subf %26, %29 : vector<8x1xf32>
    %32 = math.exp %31 : vector<8x1xf32>
    %33 = arith.mulf %30, %32 : vector<8x1xf32>
    %34 = vector.broadcast %29 : vector<8x1xf32> to vector<8x128xf32>
    %35 = arith.subf %24, %34 : vector<8x128xf32>
    %36 = math.exp %35 : vector<8x128xf32>
    %cst_17 = arith.constant dense<0.000000e+00> : vector<8xf32>
    %37 = vector.multi_reduction <add>, %36, %cst_17 [1] : vector<8x128xf32> to vector<8xf32>
    %38 = vector.shape_cast %37 : vector<8xf32> to vector<8x1xf32>
    %39 = arith.addf %33, %38 : vector<8x1xf32>
    %c0_18 = arith.constant 0 : index
    %c0_19 = arith.constant 0 : index
    %40 = vector.load %arg9[%c0_18, %c0_19] : memref<8x1xf32, #tpu.memory_space<vmem>>, vector<8x1xf32>
    tpu.vector_store %arg9[%c0_18, %c0_19], %39 {strides = array<i32>} : memref<8x1xf32, #tpu.memory_space<vmem>>, vector<8x1xf32>,
    %c0_20 = arith.constant 0 : index
    %c0_21 = arith.constant 0 : index
    %41 = vector.load %arg8[%c0_20, %c0_21] : memref<8x1xf32, #tpu.memory_space<vmem>>, vector<8x1xf32>
    tpu.vector_store %arg8[%c0_20, %c0_21], %29 {strides = array<i32>} : memref<8x1xf32, #tpu.memory_space<vmem>>, vector<8x1xf32>,
    %c0_22 = arith.constant 0 : index
    %c0_23 = arith.constant 0 : index
    %42 = vector.load %arg10[%c0_22, %c0_23] : memref<8x1xf32, #tpu.memory_space<vmem>>, vector<8x1xf32>
    %cst_24 = arith.constant 0.000000e+00 : f32
    %43 = vector.broadcast %cst_24 : f32 to vector<8x128xf32>
    %44 = arith.select %20, %24, %43 : vector<8x128xi1>, vector<8x128xf32>
    %cst_25 = arith.constant dense<0.000000e+00> : vector<8xf32>
    %45 = vector.multi_reduction <add>, %44, %cst_25 [1] : vector<8x128xf32> to vector<8xf32>
    %46 = vector.shape_cast %45 : vector<8xf32> to vector<8x1xf32>
    %47 = arith.addf %42, %46 : vector<8x1xf32>
    %c0_26 = arith.constant 0 : index
    %c0_27 = arith.constant 0 : index
    %48 = vector.load %arg10[%c0_26, %c0_27] : memref<8x1xf32, #tpu.memory_space<vmem>>, vector<8x1xf32>
    tpu.vector_store %arg10[%c0_26, %c0_27], %47 {strides = array<i32>} : memref<8x1xf32, #tpu.memory_space<vmem>>, vector<8x1xf32>,
    %c3_i32 = arith.constant 3 : i32
    %49 = arith.cmpi eq, %arg1, %c3_i32 : i32
    %50 = arith.extui %49 : i1 to i32
    %c0_i32_28 = arith.constant 0 : i32
    %51 = arith.cmpi ne, %50, %c0_i32_28 : i32
    scf.if %51 {
      %c0_29 = arith.constant 0 : index
      %c0_30 = arith.constant 0 : index
      %52 = vector.load %arg8[%c0_29, %c0_30] : memref<8x1xf32, #tpu.memory_space<vmem>>, vector<8x1xf32>
      %c0_31 = arith.constant 0 : index
      %c0_32 = arith.constant 0 : index
      %53 = vector.load %arg9[%c0_31, %c0_32] : memref<8x1xf32, #tpu.memory_space<vmem>>, vector<8x1xf32>
      %54 = math.log %53 : vector<8x1xf32>
      %55 = arith.addf %52, %54 : vector<8x1xf32>
      %c0_33 = arith.constant 0 : index
      %c0_34 = arith.constant 0 : index
      %56 = vector.load %arg10[%c0_33, %c0_34] : memref<8x1xf32, #tpu.memory_space<vmem>>, vector<8x1xf32>
      %57 = arith.subf %55, %56 : vector<8x1xf32>
      %c0_35 = arith.constant 0 : index
      %c0_36 = arith.constant 0 : index
      %58 = vector.load %arg6[%c0_35, %c0_36] : memref<8x1xf32, #tpu.memory_space<vmem>>, vector<8x1xf32>
      tpu.vector_store %arg6[%c0_35, %c0_36], %57 {strides = array<i32>} : memref<8x1xf32, #tpu.memory_space<vmem>>, vector<8x1xf32>,
    } else {
    }
    return
  }
  func.func @transform_0(%arg0: i32, %arg1: i32) -> (i32, i32) {
    %c0_i32 = arith.constant 0 : i32
    %c0_i32_0 = arith.constant 0 : i32
    return %arg0, %c0_i32 : i32, i32
  }
  func.func @transform_1(%arg0: i32, %arg1: i32) -> (i32, i32) {
    %c0_i32 = arith.constant 0 : i32
    %c0_i32_0 = arith.constant 0 : i32
    return %arg1, %c0_i32 : i32, i32
  }
  func.func @transform_2(%arg0: i32, %arg1: i32) -> (i32, i32) {
    %c0_i32 = arith.constant 0 : i32
    %c0_i32_0 = arith.constant 0 : i32
    return %arg0, %c0_i32 : i32, i32
  }
  func.func @transform_3(%arg0: i32, %arg1: i32) -> (i32, i32) {
    %c0_i32 = arith.constant 0 : i32
    return %arg0, %arg1 : i32, i32
  }
  func.func @transform_4(%arg0: i32, %arg1: i32) -> (i32, i32) {
    %c0_i32 = arith.constant 0 : i32
    %c0_i32_0 = arith.constant 0 : i32
    return %arg0, %c0_i32 : i32, i32
  }
}

</mosaic_0001>

<llo_original>
// kernel: tpu_custom_call.1
$region0: #{tpu_custom_call.1}
  #allocation0 [shape = 'u32[]', space=smem, size = 0x4, offset = 0x4, fixed_abs, tag = 'smem constant byte address 0x4 - core index']
  #allocation1 [shape = 'u32[144,128]{1,0:T(1,128)}', space=vmem, size = 0x12000, scoped, tag = 'internal scratch']
  #allocation2 [shape = 'f32[8,128]{1,0:T(8,128)}', space=vmem, size = 0x1000, scoped, tag = 'scratch operand']
  #allocation3 [shape = 'f32[8,1]{1,0:T(8,128)}', space=vmem, size = 0x1000, scoped, tag = 'scratch operand']
  #allocation4 [shape = 'f32[8,1]{1,0:T(8,128)}', space=vmem, size = 0x1000, scoped, tag = 'scratch operand']
  #allocation5 [shape = 'f32[8,1]{1,0:T(8,128)}', space=vmem, size = 0x1000, scoped, tag = 'scratch operand']
  %s0 = inlined_call_operand.vmem [shape: f32[8,128], index: 0, kind: input, shape index: {}]
  %s1 = inlined_call_operand.hbm [shape: f32[512,128], index: 1, kind: input, shape index: {}]
  %s2 = inlined_call_operand.vmem [shape: s32[8,1], index: 2, kind: input, shape index: {}]
  %s3 = inlined_call_operand.hbm [shape: f32[8,512], index: 3, kind: output, shape index: {0}]
  %s4 = inlined_call_operand.vmem [shape: f32[8,1], index: 4, kind: output, shape index: {1}]
  %5 = xla_tuple %s3, %s4
  %s6 = sld [smem:[#allocation0]]
  $region65: #{tpu_custom_call.1} parent=0
    _
  %s8 = ssub.s32 1, %s6
  %s9 = scalar_select 0, %s8, %s6
  $region1: #{tpu_custom_call.1} parent=0
    #allocation6 [shape = 'u8[131072]{0}', space=vmem, size = 0x20000, scoped, tag = 'input window, operand 1']
    #allocation7 [shape = 's32[2]{0}', space=sflag, size = 0x8, scoped, tag = 'scoped memory for tpu_custom_call.1']
    #allocation8 [shape = 's32[2]{0}', space=sflag, size = 0x8, scoped, tag = 'scoped memory for tpu_custom_call.1']
    #allocation9 [shape = 'u8[8192]{0}', space=vmem, size = 0x2000, scoped, tag = 'output window, operand 0']
    %10 = vsyncpa [#allocation7], 0
    %s11 = scalar_lea.sflag [#allocation7], 1
    %12 = vsyncpa %s11, 0
    %13 = vsyncpa [#allocation8], 0
    %s14 = scalar_lea.sflag [#allocation8], 1
    %15 = vsyncpa %s14, 0
    loop: start=0, step=1, limit=6
    $region2: #{tpu_custom_call.1} parent=1 // loop_pre_header
      _
    $region3: #{tpu_custom_call.1} parent=1 // loop_header
      %s17 = sphi 0, %s21
      %p18 = scmp.ge.s32.totalorder %s17, 6
      %s24 = sphi 0, %s36
      %s25 = sphi 0, %s32
      %s26 = sphi 0, %s24
      %s27 = sphi 0, %s25
      %s28 = sphi 0, %s26
      %s29 = sphi 0, %s27
      %s39 = sphi 0, %s41
      %s42 = sphi 0, %s39
      %s43 = sphi 0, %s42
      %s59 = sphi 0, %s43
      %s65 = sphi 0, %s67
      %s68 = sphi 0, %s65
      %s69 = sphi 0, %s68
      %s85 = sphi 0, %s69
      %s91 = sphi 0, %s93
      %s94 = sphi 0, %s91
      %s95 = sphi 0, %s94
      %s111 = sphi 0, %s95
      %s119 = sphi 0, %s121
      %s122 = sphi 0, %s119
      %s123 = sphi 0, %s122
      %s139 = sphi 0, %s123
      %s145 = sphi 0, %s147
      %s148 = sphi 0, %s145
      %s149 = sphi 0, %s148
      %s165 = sphi 0, %s149
    $region4: #{tpu_custom_call.1} parent=1 // loop_header_branch
      %20 = sbr.rel (%p18) target = $region8
    $region5: #{tpu_custom_call.1} parent=1 // loop_body
      %s22 = ssub.s32 %s17, 1
      %s23 = ssub.s32 %s17, 2
      %s30 = sadd.s32 1, %s25
      %p31 = scmp.ge.s32.totalorder %s30, 4
      %s32 = scalar_select %p31, 0, %s30
      %s33 = sadd.s32 1, %s24
      %s34 = scalar_select %p31, %s33, %s24
      %p35 = scmp.ge.s32.totalorder %s34, 1
      %s36 = scalar_select %p35, 0, %s34
      %s37 = ssub.s32 %s24, %s36
      %p38 = scmp.eq.s32.totalorder %s37, 0
      %s40 = sadd.s32 %s39, 1
      %s41 = scalar_select %p38, %s39, %s40
      %p44 = pneg %p38
      %p45 = scmp.eq.s32.totalorder %s17, 3
      %p46 = por %p44, %p45
      %p47 = scmp.ne.s32.totalorder %s39, %s42
      %p48 = scmp.eq.s32.totalorder %s17, 0
      %p49 = por %p47, %p48
      %p50 = scmp.ne.s32.totalorder %s39, %s42
      %p51 = scmp.eq.s32.totalorder %s22, 3
      %p52 = por %p50, %p51
      %p53 = scmp.ne.s32.totalorder %s42, %s43
      %p54 = scmp.eq.s32.totalorder %s22, 0
      %p55 = por %p53, %p54
      %p56 = scmp.ne.s32.totalorder %s42, %s43
      %p57 = scmp.eq.s32.totalorder %s23, 3
      %p58 = por %p56, %p57
      %p60 = scmp.ne.s32.totalorder %s43, %s59
      %p61 = scmp.eq.s32.totalorder %s23, 0
      %p62 = por %p60, %p61
      %s63 = ssub.s32 %s25, %s32
      %p64 = scmp.eq.s32.totalorder %s63, 0
      %s66 = sadd.s32 %s65, 1
      %s67 = scalar_select %p64, %s65, %s66
      %p70 = pneg %p64
      %p71 = scmp.eq.s32.totalorder %s17, 3
      %p72 = por %p70, %p71
      %p73 = scmp.ne.s32.totalorder %s65, %s68
      %p74 = scmp.eq.s32.totalorder %s17, 0
      %p75 = por %p73, %p74
      %p76 = scmp.ne.s32.totalorder %s65, %s68
      %p77 = scmp.eq.s32.totalorder %s22, 3
      %p78 = por %p76, %p77
      %p79 = scmp.ne.s32.totalorder %s68, %s69
      %p80 = scmp.eq.s32.totalorder %s22, 0
      %p81 = por %p79, %p80
      %p82 = scmp.ne.s32.totalorder %s68, %s69
      %p83 = scmp.eq.s32.totalorder %s23, 3
      %p84 = por %p82, %p83
      %p86 = scmp.ne.s32.totalorder %s69, %s85
      %p87 = scmp.eq.s32.totalorder %s23, 0
      %p88 = por %p86, %p87
      %s89 = ssub.s32 %s24, %s36
      %p90 = scmp.eq.s32.totalorder %s89, 0
      %s92 = sadd.s32 %s91, 1
      %s93 = scalar_select %p90, %s91, %s92
      %p96 = pneg %p90
      %p97 = scmp.eq.s32.totalorder %s17, 3
      %p98 = por %p96, %p97
      %p99 = scmp.ne.s32.totalorder %s91, %s94
      %p100 = scmp.eq.s32.totalorder %s17, 0
      %p101 = por %p99, %p100
      %p102 = scmp.ne.s32.totalorder %s91, %s94
      %p103 = scmp.eq.s32.totalorder %s22, 3
      %p104 = por %p102, %p103
      %p105 = scmp.ne.s32.totalorder %s94, %s95
      %p106 = scmp.eq.s32.totalorder %s22, 0
      %p107 = por %p105, %p106
      %p108 = scmp.ne.s32.totalorder %s94, %s95
      %p109 = scmp.eq.s32.totalorder %s23, 3
      %p110 = por %p108, %p109
      %p112 = scmp.ne.s32.totalorder %s95, %s111
      %p113 = scmp.eq.s32.totalorder %s23, 0
      %p114 = por %p112, %p113
      %s115 = ssub.s32 %s24, %s36
      %s116 = ssub.s32 %s25, %s32
      %s117 = sor.u32 %s115, %s116
      %p118 = scmp.eq.s32.totalorder %s117, 0
      %s120 = sadd.s32 %s119, 1
      %s121 = scalar_select %p118, %s119, %s120
      %p124 = pneg %p118
      %p125 = scmp.eq.s32.totalorder %s17, 3
      %p126 = por %p124, %p125
      %p127 = scmp.ne.s32.totalorder %s119, %s122
      %p128 = scmp.eq.s32.totalorder %s17, 0
      %p129 = por %p127, %p128
      %p130 = scmp.ne.s32.totalorder %s119, %s122
      %p131 = scmp.eq.s32.totalorder %s22, 3
      %p132 = por %p130, %p131
      %p133 = scmp.ne.s32.totalorder %s122, %s123
      %p134 = scmp.eq.s32.totalorder %s22, 0
      %p135 = por %p133, %p134
      %p136 = scmp.ne.s32.totalorder %s122, %s123
      %p137 = scmp.eq.s32.totalorder %s23, 3
      %p138 = por %p136, %p137
      %p140 = scmp.ne.s32.totalorder %s123, %s139
      %p141 = scmp.eq.s32.totalorder %s23, 0
      %p142 = por %p140, %p141
      %s143 = ssub.s32 %s24, %s36
      %p144 = scmp.eq.s32.totalorder %s143, 0
      %s146 = sadd.s32 %s145, 1
      %s147 = scalar_select %p144, %s145, %s146
      %p150 = pneg %p144
      %p151 = scmp.eq.s32.totalorder %s17, 3
      %p152 = por %p150, %p151
      %p153 = scmp.ne.s32.totalorder %s145, %s148
      %p154 = scmp.eq.s32.totalorder %s17, 0
      %p155 = por %p153, %p154
      %p156 = scmp.ne.s32.totalorder %s145, %s148
      %p157 = scmp.eq.s32.totalorder %s22, 3
      %p158 = por %p156, %p157
      %p159 = scmp.ne.s32.totalorder %s148, %s149
      %p160 = scmp.eq.s32.totalorder %s22, 0
      %p161 = por %p159, %p160
      %p162 = scmp.ne.s32.totalorder %s148, %s149
      %p163 = scmp.eq.s32.totalorder %s23, 3
      %p164 = por %p162, %p163
      %p166 = scmp.ne.s32.totalorder %s149, %s165
      %p167 = scmp.eq.s32.totalorder %s23, 0
      %p168 = por %p166, %p167
      %p169 = scmp.le.s32.totalorder 1, %s17
      %p170 = scmp.lt.s32.totalorder %s17, 5
      %p171 = pnand %p169, %p170
      %p172 = pneg %p171
      // Predicated region
      $region9: #{tpu_custom_call.1} parent=5 // pred_check
        _
      $region10: #{tpu_custom_call.1} parent=5 // pred_check_branch
        %174 = sbr.rel (%p171) target = $region12
      $region11: #{tpu_custom_call.1} parent=5 // pred_region
        %s175 = ssub.s32 %s17, 1
        // Predicated region
        $region13: #{tpu_custom_call.1} parent=11 // pred_check
          %p176 = pneg %p55
        $region14: #{tpu_custom_call.1} parent=11 // pred_check_branch
          %178 = sbr.rel (%p176) target = $region16
        $region15: #{tpu_custom_call.1} parent=11 // pred_region
          %p179 = scmp.lt.s32.totalorder %s26, 0
          %s180 = scalar_select %p179, %s26, 0
          %s181 = smul.addr %s180, 8
          %s182 = scalar_lea.vmem %s0, %s181
        $region16: #{tpu_custom_call.1} parent=11 // pred_fallthru
          _
        // Predicated region
        $region17: #{tpu_custom_call.1} parent=11 // pred_check
          %p183 = pneg %p107
        $region18: #{tpu_custom_call.1} parent=11 // pred_check_branch
          %185 = sbr.rel (%p183) target = $region20
        $region19: #{tpu_custom_call.1} parent=11 // pred_region
          %p186 = scmp.lt.s32.totalorder %s26, 0
          %s187 = scalar_select %p186, %s26, 0
          %s188 = smul.addr %s187, 8
          %s189 = scalar_lea.vmem %s2, %s188
        $region20: #{tpu_custom_call.1} parent=11 // pred_fallthru
          _
      $region12: #{tpu_custom_call.1} parent=5 // pred_fallthru
        _
      %p190 = scmp.lt.s32.totalorder %s17, 4
      // Predicated region
      $region21: #{tpu_custom_call.1} parent=5 // pred_check
        %p191 = pneg %p190
      $region22: #{tpu_custom_call.1} parent=5 // pred_check_branch
        %193 = sbr.rel (%p191) target = $region24
      $region23: #{tpu_custom_call.1} parent=5 // pred_region
        // Predicated region
        $region25: #{tpu_custom_call.1} parent=23 // pred_check
          %p194 = pneg %p75
        $region26: #{tpu_custom_call.1} parent=23 // pred_check_branch
          %196 = sbr.rel (%p194) target = $region28
        $region27: #{tpu_custom_call.1} parent=23 // pred_region
          %s197 = sand.u32 %s65, 1
          %s198 = scalar_lea.sflag [#allocation7], %s197
          %s199 = sand.u32 %s65, 1
          %s200 = smul.addr %s199, 128
          %s201 = scalar_lea.vmem [#allocation6], %s200
          %s202 = smul.u32 16, %s25
          %s204 = ssub.s32 2048, 2048
          %205 = vsyncadd %s198, %s204
          %s206 = smul.addr %s202, 128
          %s207 = scalar_lea.hbm %s1, %s206
          %s208 = sshll.u32 %s201, 4
          %s209 = int_to_ptr.vmem [resolvable:$true] %s208
          %214 = dma.hbm_to_vmem [thread:$0]  %s207, 2048, %s209, %s198, 128, 128, 8
        $region28: #{tpu_custom_call.1} parent=23 // pred_fallthru
          _
      $region24: #{tpu_custom_call.1} parent=5 // pred_fallthru
        _
      %p215 = scmp.le.s32.totalorder 1, %s17
      %p216 = scmp.lt.s32.totalorder %s17, 5
      %p217 = pnand %p215, %p216
      %p218 = pneg %p217
      // Predicated region
      $region29: #{tpu_custom_call.1} parent=5 // pred_check
        _
      $region30: #{tpu_custom_call.1} parent=5 // pred_check_branch
        %220 = sbr.rel (%p217) target = $region32
      $region31: #{tpu_custom_call.1} parent=5 // pred_region
        %s221 = ssub.s32 %s17, 1
        %s222 = sand.u32 %s68, 1
        %s223 = scalar_lea.sflag [#allocation7], %s222
        %s224 = sand.u32 %s68, 1
        %s225 = smul.addr %s224, 128
        %s226 = scalar_lea.vmem [#allocation6], %s225
        // Predicated region
        $region33: #{tpu_custom_call.1} parent=31 // pred_check
          %p227 = pneg %p81
        $region34: #{tpu_custom_call.1} parent=31 // pred_check_branch
          %229 = sbr.rel (%p227) target = $region36
        $region35: #{tpu_custom_call.1} parent=31 // pred_region
          %230 = dma.done %s223, 2048
        $region36: #{tpu_custom_call.1} parent=31 // pred_fallthru
          _
        %p231 = scmp.lt.s32.totalorder %s26, 0
        %s232 = scalar_select %p231, %s26, 0
        %s233 = smul.addr %s232, 8
        %s234 = scalar_lea.vmem %s0, %s233
        %p235 = pneg %p55
        %p236 = pneg %p52
        %s237 = sand.u32 %s68, 1
        %s238 = scalar_lea.sflag [#allocation7], %s237
        %s239 = sand.u32 %s68, 1
        %s240 = smul.addr %s239, 128
        %s241 = scalar_lea.vmem [#allocation6], %s240
        %p242 = pneg %p81
        %p243 = pneg %p78
        %p244 = scmp.lt.s32.totalorder %s26, 0
        %s245 = scalar_select %p244, %s26, 0
        %s246 = smul.addr %s245, 8
        %s247 = scalar_lea.vmem %s2, %s246
        %p248 = pneg %p107
        %p249 = pneg %p104
        %p250 = pneg %p135
        %p251 = pneg %p132
        %s252 = sand.u32 %s122, 1
        %s253 = scalar_lea.sflag [#allocation8], %s252
        %s254 = sand.u32 %s122, 1
        %s255 = smul.addr %s254, 8
        %s256 = scalar_lea.vmem [#allocation9], %s255
        %p257 = pneg %p161
        %p258 = pneg %p158
        %p259 = scmp.lt.s32.totalorder %s26, 0
        %s260 = scalar_select %p259, %s26, 0
        %s261 = smul.addr %s260, 8
        %s262 = scalar_lea.vmem %s4, %s261
        %p263 = scmp.lt.s32.totalorder %s26, 0
        %s264 = scalar_select %p263, %s26, 0
        %s265 = smul.addr %s264, 8
        %s266 = scalar_lea.vmem %s0, %s265
        %s267 = smul.u32 16, %s27
        %p268 = scmp.lt.s32.totalorder %s26, 0
        %s269 = scalar_select %p268, %s26, 0
        %s270 = smul.addr %s269, 8
        %s271 = scalar_lea.vmem %s2, %s270
        %p272 = scmp.lt.s32.totalorder %s26, 0
        %s273 = scalar_select %p272, %s26, 0
        %s274 = smul.addr %s273, 8
        %s275 = scalar_lea.vmem %s4, %s274
        %p276 = scmp.eq.s32.totalorder %s27, 0
        // Predicated region
        $region37: #{tpu_custom_call.1} parent=31 // pred_check
          %p277 = pneg %p276
        $region38: #{tpu_custom_call.1} parent=31 // pred_check_branch
          %279 = sbr.rel (%p277) target = $region40
        $region39: #{tpu_custom_call.1} parent=31 // pred_region
          %v280 = vld [vmem:[%s266] sm:$0xff]
          %v281 = vmul.f32 %v280, %v280
          %282 = vadd.xlane.f32.xlu0 %v281
          %v283 = vpop.xlane.xlu0 %282
          %v284 = vrsqrt.pop %v283
          %v285 = vmin.f32 %v284, 100000.0
          %v286 = vmul.f32 %v285, 64.0
          %v287 = vmul.f32 %v280, %v286
          %288 = vst [vmem:[#allocation2] sm:$0xff] %v287
          %vm289 = vcmask 7168
          %290 = vst.msk [vmem:[#allocation3] sm:$0xff] %vm289, -inf
          %291 = vst.msk [vmem:[#allocation4] sm:$0xff] %vm289, 0.0
          %292 = vst.msk [vmem:[#allocation5] sm:$0xff] %vm289, 0.0
        $region40: #{tpu_custom_call.1} parent=31 // pred_fallthru
          _
        %v293 = vld [vmem:[%s226] sm:$0xff]
        %v294 = vld [vmem:[%s226 + $0x8] sm:$0xff]
        %v295 = vld [vmem:[%s226 + $0x10] sm:$0xff]
        %v296 = vld [vmem:[%s226 + $0x18] sm:$0xff]
        %v297 = vld [vmem:[%s226 + $0x20] sm:$0xff]
        %v298 = vld [vmem:[%s226 + $0x28] sm:$0xff]
        %v299 = vld [vmem:[%s226 + $0x30] sm:$0xff]
        %v300 = vld [vmem:[%s226 + $0x38] sm:$0xff]
        %v301 = vld [vmem:[%s226 + $0x40] sm:$0xff]
        %v302 = vld [vmem:[%s226 + $0x48] sm:$0xff]
        %v303 = vld [vmem:[%s226 + $0x50] sm:$0xff]
        %v304 = vld [vmem:[%s226 + $0x58] sm:$0xff]
        %v305 = vld [vmem:[%s226 + $0x60] sm:$0xff]
        %v306 = vld [vmem:[%s226 + $0x68] sm:$0xff]
        %v307 = vld [vmem:[%s226 + $0x70] sm:$0xff]
        %v308 = vld [vmem:[%s226 + $0x78] sm:$0xff]
        %v309 = vmul.f32 %v293, %v293
        %v310 = vmul.f32 %v294, %v294
        %v311 = vmul.f32 %v295, %v295
        %v312 = vmul.f32 %v296, %v296
        %v313 = vmul.f32 %v297, %v297
        %v314 = vmul.f32 %v298, %v298
        %v315 = vmul.f32 %v299, %v299
        %v316 = vmul.f32 %v300, %v300
        %v317 = vmul.f32 %v301, %v301
        %v318 = vmul.f32 %v302, %v302
        %v319 = vmul.f32 %v303, %v303
        %v320 = vmul.f32 %v304, %v304
        %v321 = vmul.f32 %v305, %v305
        %v322 = vmul.f32 %v306, %v306
        %v323 = vmul.f32 %v307, %v307
        %v324 = vmul.f32 %v308, %v308
        %325 = vadd.xlane.f32.xlu0 %v309
        %v326 = vpop.xlane.xlu0 %325
        %327 = vadd.xlane.f32.xlu0 %v310
        %v328 = vpop.xlane.xlu0 %327
        %329 = vadd.xlane.f32.xlu0 %v311
        %v330 = vpop.xlane.xlu0 %329
        %331 = vadd.xlane.f32.xlu0 %v312
        %v332 = vpop.xlane.xlu0 %331
        %333 = vadd.xlane.f32.xlu0 %v313
        %v334 = vpop.xlane.xlu0 %333
        %335 = vadd.xlane.f32.xlu0 %v314
        %v336 = vpop.xlane.xlu0 %335
        %337 = vadd.xlane.f32.xlu0 %v315
        %v338 = vpop.xlane.xlu0 %337
        %339 = vadd.xlane.f32.xlu0 %v316
        %v340 = vpop.xlane.xlu0 %339
        %341 = vadd.xlane.f32.xlu0 %v317
        %v342 = vpop.xlane.xlu0 %341
        %343 = vadd.xlane.f32.xlu0 %v318
        %v344 = vpop.xlane.xlu0 %343
        %345 = vadd.xlane.f32.xlu0 %v319
        %v346 = vpop.xlane.xlu0 %345
        %347 = vadd.xlane.f32.xlu0 %v320
        %v348 = vpop.xlane.xlu0 %347
        %349 = vadd.xlane.f32.xlu0 %v321
        %v350 = vpop.xlane.xlu0 %349
        %351 = vadd.xlane.f32.xlu0 %v322
        %v352 = vpop.xlane.xlu0 %351
        %353 = vadd.xlane.f32.xlu0 %v323
        %v354 = vpop.xlane.xlu0 %353
        %355 = vadd.xlane.f32.xlu0 %v324
        %v356 = vpop.xlane.xlu0 %355
        %v357 = vrsqrt.pop %v326
        %v358 = vrsqrt.pop %v328
        %v359 = vrsqrt.pop %v330
        %v360 = vrsqrt.pop %v332
        %v361 = vrsqrt.pop %v334
        %v362 = vrsqrt.pop %v336
        %v363 = vrsqrt.pop %v338
        %v364 = vrsqrt.pop %v340
        %v365 = vrsqrt.pop %v342
        %v366 = vrsqrt.pop %v344
        %v367 = vrsqrt.pop %v346
        %v368 = vrsqrt.pop %v348
        %v369 = vrsqrt.pop %v350
        %v370 = vrsqrt.pop %v352
        %v371 = vrsqrt.pop %v354
        %v372 = vrsqrt.pop %v356
        %v373 = vmin.f32 %v357, 100000.0
        %v374 = vmin.f32 %v358, 100000.0
        %v375 = vmin.f32 %v359, 100000.0
        %v376 = vmin.f32 %v360, 100000.0
        %v377 = vmin.f32 %v361, 100000.0
        %v378 = vmin.f32 %v362, 100000.0
        %v379 = vmin.f32 %v363, 100000.0
        %v380 = vmin.f32 %v364, 100000.0
        %v381 = vmin.f32 %v365, 100000.0
        %v382 = vmin.f32 %v366, 100000.0
        %v383 = vmin.f32 %v367, 100000.0
        %v384 = vmin.f32 %v368, 100000.0
        %v385 = vmin.f32 %v369, 100000.0
        %v386 = vmin.f32 %v370, 100000.0
        %v387 = vmin.f32 %v371, 100000.0
        %v388 = vmin.f32 %v372, 100000.0
        %v389 = vmul.f32 %v293, %v373
        %v390 = vmul.f32 %v294, %v374
        %v391 = vmul.f32 %v295, %v375
        %v392 = vmul.f32 %v296, %v376
        %v393 = vmul.f32 %v297, %v377
        %v394 = vmul.f32 %v298, %v378
        %v395 = vmul.f32 %v299, %v379
        %v396 = vmul.f32 %v300, %v380
        %v397 = vmul.f32 %v301, %v381
        %v398 = vmul.f32 %v302, %v382
        %v399 = vmul.f32 %v303, %v383
        %v400 = vmul.f32 %v304, %v384
        %v401 = vmul.f32 %v305, %v385
        %v402 = vmul.f32 %v306, %v386
        %v403 = vmul.f32 %v307, %v387
        %v404 = vmul.f32 %v308, %v388
        %v405 = vld [vmem:[#allocation2] sm:$0xff]
        %406 = vmatprep.subr.mxu0 0.0
        %407 = vmatpush1.xpose.msra.mxu0 %v389
        %408 = vmatprep.subr.mxu0 0.0
        %409 = vmatpush1.xpose.msra.mxu0 %v390
        %410 = vmatprep.subr.mxu0 0.0
        %411 = vmatpush1.xpose.msra.mxu0 %v391
        %412 = vmatprep.subr.mxu0 0.0
        %413 = vmatpush1.xpose.msra.mxu0 %v392
        %414 = vmatprep.subr.mxu0 0.0
        %415 = vmatpush1.xpose.msra.mxu0 %v393
        %416 = vmatprep.subr.mxu0 0.0
        %417 = vmatpush1.xpose.msra.mxu0 %v394
        %418 = vmatprep.subr.mxu0 0.0
        %419 = vmatpush1.xpose.msra.mxu0 %v395
        %420 = vmatprep.subr.mxu0 0.0
        %421 = vmatpush1.xpose.msra.mxu0 %v396
        %422 = vmatprep.subr.mxu0 0.0
        %423 = vmatpush1.xpose.msra.mxu0 %v397
        %424 = vmatprep.subr.mxu0 0.0
        %425 = vmatpush1.xpose.msra.mxu0 %v398
        %426 = vmatprep.subr.mxu0 0.0
        %427 = vmatpush1.xpose.msra.mxu0 %v399
        %428 = vmatprep.subr.mxu0 0.0
        %429 = vmatpush1.xpose.msra.mxu0 %v400
        %430 = vmatprep.subr.mxu0 0.0
        %431 = vmatpush1.xpose.msra.mxu0 %v401
        %432 = vmatprep.subr.mxu0 0.0
        %433 = vmatpush1.xpose.msra.mxu0 %v402
        %434 = vmatprep.subr.mxu0 0.0
        %435 = vmatpush1.xpose.msra.mxu0 %v403
        %436 = vmatprep.subr.mxu0 0.0
        %437 = vmatpush1.xpose.msra.mxu0 %v404
        %438 = vmatprep.subr.mxu0 0.0
        %439 = vmatpush1.xpose.msra.mxu0 0.0
        %440 = vmatprep.subr.mxu0 0.0
        %441 = vmatpush1.xpose.msra.mxu0 0.0
        %442 = vmatprep.subr.mxu0 0.0
        %443 = vmatpush1.xpose.msra.mxu0 0.0
        %444 = vmatprep.subr.mxu0 0.0
        %445 = vmatpush1.xpose.msra.mxu0 0.0
        %446 = vmatprep.subr.mxu0 0.0
        %447 = vmatpush1.xpose.msra.mxu0 0.0
        %448 = vmatprep.subr.mxu0 0.0
        %449 = vmatpush1.xpose.msra.mxu0 0.0
        %450 = vmatprep.subr.mxu0 0.0
        %451 = vmatpush1.xpose.msra.mxu0 0.0
        %452 = vmatprep.subr.mxu0 0.0
        %453 = vmatpush1.xpose.msra.mxu0 0.0
        %454 = vmatprep.subr.mxu0 0.0
        %455 = vmatpush1.xpose.msra.mxu0 0.0
        %456 = vmatprep.subr.mxu0 0.0
        %457 = vmatpush1.xpose.msra.mxu0 0.0
        %458 = vmatprep.subr.mxu0 0.0
        %459 = vmatpush1.xpose.msra.mxu0 0.0
        %460 = vmatprep.subr.mxu0 0.0
        %461 = vmatpush1.xpose.msra.mxu0 0.0
        %462 = vmatprep.subr.mxu0 0.0
        %463 = vmatpush1.xpose.msra.mxu0 0.0
        %464 = vmatprep.subr.mxu0 0.0
        %465 = vmatpush1.xpose.msra.mxu0 0.0
        %466 = vmatprep.subr.mxu0 0.0
        %467 = vmatpush1.xpose.msra.mxu0 0.0
        %468 = vmatprep.subr.mxu0 0.0
        %469 = vmatpush1.xpose.msra.mxu0 0.0
        %470 = vmatprep.mubr.f32.mxu0 0.0
        %471 = vmatmul.mubr.f32.gmra.mrb[0].mxu0 %v405
        %v472 = vpop.f32.mrb[0].mxu0
        %v473 = vadd.f32 0.0, %v472
        %v474 = vpop.f32.mrb[0].mxu0
        %475 = vdwg.mxu0
        %v476 = vlaneseq
        %v477 = vand.u32 %v476, 127
        %v478 = vld [vmem:[%s271] sm:$0xff]
        %s479 = smul.u32 %s27, 128
        %v480 = vstv %s479
        %v481 = vsub.s32 %v478, %v480
        %482 = vset.pattern.permute.xlu0 0
        %483 = vperm.xlu0 %482, %v481
        %v484 = vpop.permute.xlu0 %483
        %vm485 = vcmp.eq.s32.totalorder %v477, %v484
        %v486 = vsel %vm485, 25.6, 0.0
        %v487 = vsub.f32 %v473, %v486
        %488 = vst [vmem:[%s256] sm:$0xff] %v487
        %v489 = vld [vmem:[#allocation3] sm:$0xff]
        %490 = vmax.xlane.f32.xlu0 %v487
        %v491 = vpop.xlane.xlu0 %490
        %v492 = vmax.f32 %v489, %v491
        %v493 = vld [vmem:[#allocation4] sm:$0xff]
        %v494 = vsub.f32 %v489, %v492
        %v495 = vmul.f32 %v494, 1.442695
        %v496 = vpow.pop %v495
        %v497 = vmul.f32 %v493, %v496
        %499 = vset.pattern.permute.xlu0 0
        %500 = vperm.xlu0 %499, %v492
        %v501 = vpop.permute.xlu0 %500
        %v503 = vsub.f32 %v487, %v501
        %v504 = vmul.f32 %v503, 1.442695
        %v505 = vpow.pop %v504
        %506 = vadd.xlane.f32.xlu0 %v505
        %v507 = vpop.xlane.xlu0 %506
        %v508 = vadd.f32 %v497, %v507
        %vm509 = vcmask 7168
        %510 = vst.msk [vmem:[#allocation4] sm:$0xff] %vm509, %v508
        %511 = vst.msk [vmem:[#allocation3] sm:$0xff] %vm509, %v492
        %v512 = vld [vmem:[#allocation5] sm:$0xff]
        %v513 = vsel %vm485, %v487, 0.0
        %514 = vadd.xlane.f32.xlu0 %v513
        %v515 = vpop.xlane.xlu0 %514
        %v516 = vadd.f32 %v512, %v515
        %517 = vst.msk [vmem:[#allocation5] sm:$0xff] %vm509, %v516
        %p518 = scmp.eq.s32.totalorder %s27, 3
        // Predicated region
        $region41: #{tpu_custom_call.1} parent=31 // pred_check
          %p519 = pneg %p518
        $region42: #{tpu_custom_call.1} parent=31 // pred_check_branch
          %521 = sbr.rel (%p519) target = $region44
        $region43: #{tpu_custom_call.1} parent=31 // pred_region
          %v522 = vld [vmem:[#allocation3] sm:$0xff]
          %v523 = vld [vmem:[#allocation4] sm:$0xff]
          %v524 = vlog2.pop %v523
          %v525 = vmul.f32 %v524, 0.6931472
          %v526 = vadd.f32 %v522, %v525
          %v527 = vld [vmem:[#allocation5] sm:$0xff]
          %v528 = vsub.f32 %v526, %v527
          %529 = vst.msk [vmem:[%s275] sm:$0xff] %vm509, %v528
        $region44: #{tpu_custom_call.1} parent=31 // pred_fallthru
          _
        %s530 = sand.u32 %s122, 1
        %s531 = scalar_lea.sflag [#allocation8], %s530
        %s532 = sand.u32 %s122, 1
        %s533 = smul.addr %s532, 8
        %s534 = scalar_lea.vmem [#allocation9], %s533
        %p535 = scmp.lt.s32.totalorder %s26, 0
        %s536 = scalar_select %p535, %s26, 0
        %s537 = smul.addr %s536, 8
        %s538 = scalar_lea.vmem %s4, %s537
        // Predicated region
        $region45: #{tpu_custom_call.1} parent=31 // pred_check
          %p539 = pneg %p132
        $region46: #{tpu_custom_call.1} parent=31 // pred_check_branch
          %541 = sbr.rel (%p539) target = $region48
        $region47: #{tpu_custom_call.1} parent=31 // pred_region
          %s543 = ssub.s32 128, 128
          %544 = vsyncadd %s531, %s543
          %s545 = smul.addr %s26, 4
          %s546 = sadd.s32 %s27, %s545
          %s547 = smul.addr %s546, 128
          %s548 = scalar_lea.hbm %s3, %s547
          %s550 = sshll.u32 %s534, 4
          %s551 = int_to_ptr.vmem [resolvable:$true] %s550
          %553 = dma.vmem_to_hbm [thread:$0]  %s551, 128, %s548, %s531
        $region48: #{tpu_custom_call.1} parent=31 // pred_fallthru
          _
        // Predicated region
        $region49: #{tpu_custom_call.1} parent=31 // pred_check
          %p554 = pneg %p158
        $region50: #{tpu_custom_call.1} parent=31 // pred_check_branch
          %556 = sbr.rel (%p554) target = $region52
        $region51: #{tpu_custom_call.1} parent=31 // pred_region
          _
        $region52: #{tpu_custom_call.1} parent=31 // pred_fallthru
          _
        // Predicated region
        $region53: #{tpu_custom_call.1} parent=31 // pred_check
          %p557 = pneg %p158
        $region54: #{tpu_custom_call.1} parent=31 // pred_check_branch
          %559 = sbr.rel (%p557) target = $region56
        $region55: #{tpu_custom_call.1} parent=31 // pred_region
          %p560 = scmp.lt.s32.totalorder %s26, 0
          %s561 = scalar_select %p560, %s26, 0
          %s562 = smul.addr %s561, 8
          %s563 = scalar_lea.vmem %s4, %s562
        $region56: #{tpu_custom_call.1} parent=31 // pred_fallthru
          _
      $region32: #{tpu_custom_call.1} parent=5 // pred_fallthru
        _
      %p564 = scmp.le.s32.totalorder 2, %s17
      // Predicated region
      $region57: #{tpu_custom_call.1} parent=5 // pred_check
        %p565 = pneg %p564
      $region58: #{tpu_custom_call.1} parent=5 // pred_check_branch
        %567 = sbr.rel (%p565) target = $region60
      $region59: #{tpu_custom_call.1} parent=5 // pred_region
        %s568 = ssub.s32 %s17, 2
        // Predicated region
        $region61: #{tpu_custom_call.1} parent=59 // pred_check
          %p569 = pneg %p138
        $region62: #{tpu_custom_call.1} parent=59 // pred_check_branch
          %571 = sbr.rel (%p569) target = $region64
        $region63: #{tpu_custom_call.1} parent=59 // pred_region
          %s572 = sand.u32 %s123, 1
          %s573 = scalar_lea.sflag [#allocation8], %s572
          %s574 = sand.u32 %s123, 1
          %s575 = smul.addr %s574, 8
          %s576 = scalar_lea.vmem [#allocation9], %s575
          %577 = dma.done %s573, 128
        $region64: #{tpu_custom_call.1} parent=59 // pred_fallthru
          _
      $region60: #{tpu_custom_call.1} parent=5 // pred_fallthru
        _
    $region6: #{tpu_custom_call.1} parent=1 // loop_footer
      %s21 = sadd.s32 1, %s17
    $region7: #{tpu_custom_call.1} parent=1 // loop_footer_branch
      %16 = sbr.rel target = $region3
    $region8: #{tpu_custom_call.1} parent=1 // loop_exit
      _
    %578 = vsyncpa [#allocation7], 1
    %s579 = scalar_lea.sflag [#allocation7], 1
    %580 = vsyncpa %s579, 1
    %581 = vsyncpa [#allocation8], 1
    %s582 = scalar_lea.sflag [#allocation8], 1
    %583 = vsyncpa %s582, 1

</llo_original>
